<compile_context>
chip_gen: v7x
topology: tpu7x:2x2x1
jax: 0.10.0
libtpu: 0.0.40
codegen_flags: <defaults>
</compile_context>

<pallas_src>
import math
import functools

import numpy as np
import jax
import jax.numpy as jnp
from jax.experimental import pallas as pl
from jax.experimental.pallas import tpu as pltpu


# -----------------------------------------------------------------------------
# Stage 1: sinc band-pass filter bank (N_filt, K).  Tiny, runs once per call.
# -----------------------------------------------------------------------------
def _filter_bank_kernel(fbeg_ref, fend_ref, tau_ref, win_ref, filt_ref, *,
                        freq_scale):
    fbeg = fbeg_ref[...]            # (N_filt, 1)  normalized begin freq
    fend = fend_ref[...]            # (N_filt, 1)  normalized end freq
    tau = tau_ref[...]              # (1, K)       |j - (K-1)/2| / fs  (seconds)
    win = win_ref[...]              # (1, K)       Hamming window

    two_pi = 2.0 * math.pi

    def low_pass(f):                # f: (N_filt, 1)
        arg = (two_pi * (f * freq_scale)) * tau            # (N_filt, K)
        safe = jnp.where(arg == 0.0, 1.0, arg)
        # sinc with the center tap forced to exactly 1 (matches the torch
        # cat([flip(y), ones(1), y]) construction; tau[center] is exactly 0).
        y = jnp.where(arg == 0.0, 1.0, jnp.sin(safe) / safe)
        return 2.0 * f * y

    band_pass = low_pass(fend) - low_pass(fbeg)            # (N_filt, K)
    row_max = jnp.max(band_pass, axis=1, keepdims=True)
    band_pass = band_pass / row_max        # exact divide: runs once, stay f32-faithful
    filt_ref[...] = (band_pass * win).astype(filt_ref.dtype)


# -----------------------------------------------------------------------------
# Stage 2a: small N_filt -> pure-VPU accumulation (no im2col, no MXU).
#   out(N_filt, TN) = sum_k filt[:, k] * x_phase[k%s][col0 + k//s : +TN]
# -----------------------------------------------------------------------------
def _sinc_conv_vpu_kernel(filt_ref, x_ref, o_ref, *, tn, filt_dim, stride,
                          n_filt):
    j = pl.program_id(1)
    col0 = pl.multiple_of(j * tn, 128)          # tn is a multiple of 128

    acc = jnp.zeros((n_filt, tn), dtype=jnp.float32)   # lives in vregs
    for k in range(filt_dim):                   # K is small & static -> unrolled
        p = k % stride
        q = k // stride
        row = x_ref[0, pl.ds(p, 1), pl.ds(col0 + q, tn)]   # (1, tn)    f32
        w = filt_ref[:, pl.ds(k, 1)]                        # (n_filt,1) f32
        acc = acc + w * row                                 # broadcast FMA on VPU
    o_ref[0, :, :] = acc.astype(o_ref.dtype)


# -----------------------------------------------------------------------------
# Stage 2b: large N_filt -> im2col patch + single bf16 MXU matmul (f32 acc).
# -----------------------------------------------------------------------------
def _sinc_conv_mxu_kernel(filt_ref, x_ref, o_ref, patch_ref, *, tn, filt_dim,
                          stride):
    j = pl.program_id(1)
    col0 = pl.multiple_of(j * tn, 128)

    # im2col: K full-width row stores into the f32 VMEM scratch.  Every read is
    # a contiguous lane slice thanks to the wrapper-side phase deinterleave.
    for k in range(filt_dim):
        p = k % stride
        q = k // stride
        patch_ref[pl.ds(k, 1), :] = x_ref[0, pl.ds(p, 1), pl.ds(col0 + q, tn)]

    o_ref[0, :, :] = jnp.dot(
        filt_ref[...],                              # (N_filt, K) bf16
        patch_ref[...].astype(jnp.bfloat16),        # (K, TN)     bf16
        preferred_element_type=jnp.float32,
    ).astype(o_ref.dtype)


# -----------------------------------------------------------------------------
# Parameter init (identical to SincLayer.__init__, mel spaced).
# -----------------------------------------------------------------------------
def sinc_layer_init(N_filt, fs):
    low_freq_mel = 80
    high_freq_mel = 2595 * np.log10(1 + fs / 2 / 700)
    mel_points = np.linspace(low_freq_mel, high_freq_mel, N_filt)
    f_cos = 700 * (10 ** (mel_points / 2595) - 1)
    b1 = np.roll(f_cos, 1)
    b2 = np.roll(f_cos, -1)
    b1[0] = 30
    b2[-1] = fs / 2 - 100
    freq_scale = fs * 1.0
    filt_b1 = b1 / freq_scale
    filt_band = (b2 - b1) / freq_scale
    return filt_b1, filt_band


def _round_up(x, m):
    return ((x + m - 1) // m) * m


def _build_filter_bank(filt_b1, filt_band, K, fs):
    """Stage 1 pallas_call: returns the (N_filt, K) float32 filter bank."""
    N_filt = int(filt_b1.shape[0])
    freq_scale = fs * 1.0
    min_freq = 50.0
    min_band = 50.0

    f_beg = np.abs(np.asarray(filt_b1, dtype=np.float64)) + min_freq / freq_scale
    f_end = f_beg + (np.abs(np.asarray(filt_band, dtype=np.float64))
                     + min_band / freq_scale)
    f_beg32 = jnp.asarray(f_beg.astype(np.float32).reshape(N_filt, 1))
    f_end32 = jnp.asarray(f_end.astype(np.float32).reshape(N_filt, 1))

    M = (K - 1) // 2
    # |j - M| / fs reproduces [flip(t_right), 0, t_right] since sinc is even.
    tau = jnp.asarray((np.abs(np.arange(K) - M) / fs)
                      .astype(np.float32).reshape(1, K))
    n = np.linspace(0, K, K)
    window = jnp.asarray((0.54 - 0.46 * np.cos(2.0 * math.pi * n / K))
                         .astype(np.float32).reshape(1, K))

    return pl.pallas_call(
        functools.partial(_filter_bank_kernel, freq_scale=freq_scale),
        out_shape=jax.ShapeDtypeStruct((N_filt, K), jnp.float32),
        grid_spec=pltpu.PrefetchScalarGridSpec(
            num_scalar_prefetch=0,
            grid=(1,),
            in_specs=[
                pl.BlockSpec((N_filt, 1), lambda i: (0, 0)),   # f_beg
                pl.BlockSpec((N_filt, 1), lambda i: (0, 0)),   # f_end
                pl.BlockSpec((1, K), lambda i: (0, 0)),        # tau
                pl.BlockSpec((1, K), lambda i: (0, 0)),        # window
            ],
            out_specs=pl.BlockSpec((N_filt, K), lambda i: (0, 0)),
        ),
        compiler_params=pltpu.CompilerParams(
            dimension_semantics=("arbitrary",)),
    )(f_beg32, f_end32, tau, window)


# -----------------------------------------------------------------------------
# Forward pass wrapper.
# -----------------------------------------------------------------------------
def sinc_layer_forward(x, filt_b1, filt_band, Filt_dim, fs, stride=1,
                       padding=0):
    """x: (B, 1, L) float32.  Returns (B, N_filt, L_out) float32."""
    N_filt = int(filt_b1.shape[0])
    K = int(Filt_dim)

    # ---- Stage 1: build the filter bank once (f32). ----
    filt_f32 = _build_filter_bank(filt_b1, filt_band, K, fs)

    # ---- Stage 2: tiled conv1d. ----
    B = int(x.shape[0])
    assert x.shape[1] == 1, "SincLayer conv1d uses in_channels == 1"
    xs = jnp.asarray(x[:, 0, :], jnp.float32)
    if padding > 0:
        xs = jnp.pad(xs, ((0, 0), (padding, padding)))
    Lp = int(xs.shape[1])
    L_out = (Lp - K) // stride + 1
    assert L_out > 0

    # Lane-dense output tiles (multiple of 128), cap raised to 1024.
    TN = min(1024, _round_up(L_out, 128))
    num_tiles = -(-L_out // TN)
    L_out_pad = num_tiles * TN

    # Phase-deinterleave so every in-kernel read is a contiguous lane slice:
    #   planes[b, p, m] = xs[b, m*stride + p]  and  xs[t*s + k] = planes[k%s][t + k//s]
    Q = (K - 1) // stride
    Lphase = _round_up(L_out_pad + Q, 128)
    total = Lphase * stride
    if total > Lp:
        xs = jnp.pad(xs, ((0, 0), (0, total - Lp)))
    else:
        xs = xs[:, :total]   # tail samples no valid output window touches
    planes = xs.reshape(B, Lphase, stride).transpose(0, 2, 1)  # (B, stride, Lphase)

    use_mxu = N_filt > 16
    if use_mxu:
        filt_in = filt_f32.astype(jnp.bfloat16)          # MXU consumes bf16
        kernel = functools.partial(_sinc_conv_mxu_kernel, tn=TN, filt_dim=K,
                                   stride=stride)
        scratch = (pltpu.VMEM((K, TN), jnp.float32),)    # im2col patch
    else:
        filt_in = filt_f32
        kernel = functools.partial(_sinc_conv_vpu_kernel, tn=TN, filt_dim=K,
                                   stride=stride, n_filt=N_filt)
        scratch = ()

    flops = 2 * B * N_filt * K * L_out_pad
    bytes_accessed = (B * stride * Lphase * 4
                      + N_filt * K * filt_in.dtype.itemsize
                      + B * N_filt * L_out * 4)

    out = pl.pallas_call(
        kernel,
        # Exact L_out: Pallas masks the ragged last block's writeback -> no
        # wrapper-side slice copy of the (dominant) output tensor.
        out_shape=jax.ShapeDtypeStruct((B, N_filt, L_out), jnp.float32),
        grid_spec=pltpu.PrefetchScalarGridSpec(
            num_scalar_prefetch=0,
            grid=(B, num_tiles),
            in_specs=[
                # filter bank: constant across the whole grid (fetched once)
                pl.BlockSpec((N_filt, K), lambda b, j: (0, 0)),
                # x phase planes: block index depends only on b -> resident
                # across all L_out tiles of a batch row.
                pl.BlockSpec((1, stride, Lphase), lambda b, j: (b, 0, 0)),
            ],
            out_specs=pl.BlockSpec((1, N_filt, TN), lambda b, j: (b, 0, j)),
            scratch_shapes=scratch,
        ),
        compiler_params=pltpu.CompilerParams(
            # batch axis first -> on v7x the cross-core split prefers b and the
            # resident x row is not re-fetched per core; no-op on v5e/v6e.
            dimension_semantics=("parallel", "arbitrary"),
            vmem_limit_bytes=32 * 1024 * 1024),
        cost_estimate=pl.CostEstimate(flops=flops, transcendentals=0,
                                      bytes_accessed=bytes_accessed),
    )(filt_in, planes)

    return out


# -----------------------------------------------------------------------------
# Literal numpy port of the PyTorch forward, for checking.
# -----------------------------------------------------------------------------
def _reference_np(x, filt_b1, filt_band, Filt_dim, fs, stride=1, padding=0):
    N_filt = filt_b1.shape[0]
    K = Filt_dim
    freq_scale = fs * 1.0
    f_beg = np.abs(filt_b1) + 50.0 / freq_scale
    f_end = f_beg + (np.abs(filt_band) + 50.0 / freq_scale)
    t_right = (np.linspace(1, (K - 1) / 2, int((K - 1) / 2)) / fs).astype(np.float32)
    n = np.linspace(0, K, K)
    window = (0.54 - 0.46 * np.cos(2 * math.pi * n / K)).astype(np.float32)

    def sinc_np(band, t):
        y_right = np.sin(2 * math.pi * band * t) / (2 * math.pi * band * t)
        y_left = y_right[::-1]
        return np.concatenate([y_left, np.ones(1), y_right]).astype(np.float32)

    filters = np.zeros((N_filt, K), dtype=np.float32)
    for i in range(N_filt):
        b = np.float32(f_beg[i])
        e = np.float32(f_end[i])
        lp1 = 2 * b * sinc_np(b * freq_scale, t_right)
        lp2 = 2 * e * sinc_np(e * freq_scale, t_right)
        bp = lp2 - lp1
        bp = bp / bp.max()
        filters[i] = bp * window

    xs = x[:, 0, :].astype(np.float32)
    if padding > 0:
        xs = np.pad(xs, ((0, 0), (padding, padding)))
    Lp = xs.shape[1]
    L_out = (Lp - K) // stride + 1
    B = x.shape[0]
    out = np.zeros((B, N_filt, L_out), dtype=np.float32)
    for t in range(L_out):
        seg = xs[:, t * stride:t * stride + K]       # (B, K)
        out[:, :, t] = seg @ filters.T
    return out


if __name__ == "__main__":
    key = jax.random.PRNGKey(0)
    k1, k2 = jax.random.split(key)

    # --- Test 1: small filter count -> pure-VPU path, stride 1. ---
    N_filt, Filt_dim, fs = 8, 17, 16000      # Filt_dim odd, as the module requires
    B, L, stride, padding = 2, 128, 1, 0
    filt_b1, filt_band = sinc_layer_init(N_filt, fs)
    x = jax.random.normal(k1, (B, 1, L), dtype=jnp.float32)
    out = jax.block_until_ready(
        sinc_layer_forward(x, filt_b1, filt_band, Filt_dim, fs, stride, padding))
    ref = _reference_np(np.asarray(x), filt_b1, filt_band, Filt_dim, fs,
                        stride, padding)
    assert out.shape == ref.shape
    np.testing.assert_allclose(np.asarray(out), ref, rtol=2e-3, atol=2e-3)

    # --- Test 2: larger bank, stride 3, padding -> im2col + MXU path,
    #     multi-tile grid with a ragged (masked) last output block. ---
    N_filt, Filt_dim, fs = 64, 33, 16000
    B, L, stride, padding = 2, 3200, 3, 2
    filt_b1, filt_band = sinc_layer_init(N_filt, fs)
    x = jax.random.normal(k2, (B, 1, L), dtype=jnp.float32)
    out = jax.block_until_ready(
        sinc_layer_forward(x, filt_b1, filt_band, Filt_dim, fs, stride, padding))
    ref = _reference_np(np.asarray(x), filt_b1, filt_band, Filt_dim, fs,
                        stride, padding)
    assert out.shape == ref.shape
    np.testing.assert_allclose(np.asarray(out), ref, rtol=5e-2, atol=5e-2)

    print("KERNEL_OK")
</pallas_src>

<mosaic_0001>
module attributes {stable_mosaic.version = 11 : i64} {
  func.func @_filter_bank_kernel(%arg0: i32, %arg1: memref<8x1xf32, #tpu.memory_space<vmem>>, %arg2: memref<8x1xf32, #tpu.memory_space<vmem>>, %arg3: memref<1x17xf32, #tpu.memory_space<vmem>>, %arg4: memref<1x17xf32, #tpu.memory_space<vmem>>, %arg5: memref<8x17xf32, #tpu.memory_space<vmem>>) attributes {dimension_semantics = [#tpu.dimension_semantics<arbitrary>], iteration_bounds = array<i64: 1>, scalar_prefetch = 0 : i64, scratch_operands = 0 : i64, tpu.core_type = #tpu.core_type<tc>, window_params = [{pipeline_mode = #tpu.pipeline_mode<synchronous>, transform_indices = @transform_0, window_bounds = array<i64: 8, 1>}, {pipeline_mode = #tpu.pipeline_mode<synchronous>, transform_indices = @transform_1, window_bounds = array<i64: 8, 1>}, {pipeline_mode = #tpu.pipeline_mode<synchronous>, transform_indices = @transform_2, window_bounds = array<i64: 1, 17>}, {pipeline_mode = #tpu.pipeline_mode<synchronous>, transform_indices = @transform_3, window_bounds = array<i64: 1, 17>}, {pipeline_mode = #tpu.pipeline_mode<synchronous>, transform_indices = @transform_4, window_bounds = array<i64: 8, 17>}]} {
    %c0 = arith.constant 0 : index
    %c0_0 = arith.constant 0 : index
    %0 = vector.load %arg1[%c0, %c0_0] : memref<8x1xf32, #tpu.memory_space<vmem>>, vector<8x1xf32>
    %c0_1 = arith.constant 0 : index
    %c0_2 = arith.constant 0 : index
    %1 = vector.load %arg2[%c0_1, %c0_2] : memref<8x1xf32, #tpu.memory_space<vmem>>, vector<8x1xf32>
    %c0_3 = arith.constant 0 : index
    %c0_4 = arith.constant 0 : index
    %2 = vector.load %arg3[%c0_3, %c0_4] : memref<1x17xf32, #tpu.memory_space<vmem>>, vector<1x17xf32>
    %c0_5 = arith.constant 0 : index
    %c0_6 = arith.constant 0 : index
    %3 = vector.load %arg4[%c0_5, %c0_6] : memref<1x17xf32, #tpu.memory_space<vmem>>, vector<1x17xf32>
    %cst = arith.constant 1.600000e+04 : f32
    %4 = vector.broadcast %cst : f32 to vector<8x1xf32>
    %5 = arith.mulf %1, %4 : vector<8x1xf32>
    %cst_7 = arith.constant 6.28318548 : f32
    %6 = vector.broadcast %cst_7 : f32 to vector<8x1xf32>
    %7 = arith.mulf %6, %5 : vector<8x1xf32>
    %8 = vector.broadcast %7 : vector<8x1xf32> to vector<8x17xf32>
    %9 = vector.broadcast %2 : vector<1x17xf32> to vector<8x17xf32>
    %10 = arith.mulf %8, %9 : vector<8x17xf32>
    %cst_8 = arith.constant 0.000000e+00 : f32
    %11 = vector.broadcast %cst_8 : f32 to vector<8x17xf32>
    %12 = arith.cmpf oeq, %10, %11 : vector<8x17xf32>
    %cst_9 = arith.constant 1.000000e+00 : f32
    %13 = vector.broadcast %cst_9 : f32 to vector<8x17xf32>
    %14 = arith.select %12, %13, %10 : vector<8x17xi1>, vector<8x17xf32>
    %cst_10 = arith.constant 0.000000e+00 : f32
    %15 = vector.broadcast %cst_10 : f32 to vector<8x17xf32>
    %16 = arith.cmpf oeq, %10, %15 : vector<8x17xf32>
    %17 = math.sin %14 : vector<8x17xf32>
    %18 = arith.divf %17, %14 : vector<8x17xf32>
    %cst_11 = arith.constant 1.000000e+00 : f32
    %19 = vector.broadcast %cst_11 : f32 to vector<8x17xf32>
    %20 = arith.select %16, %19, %18 : vector<8x17xi1>, vector<8x17xf32>
    %cst_12 = arith.constant 2.000000e+00 : f32
    %21 = vector.broadcast %cst_12 : f32 to vector<8x1xf32>
    %22 = arith.mulf %21, %1 : vector<8x1xf32>
    %23 = vector.broadcast %22 : vector<8x1xf32> to vector<8x17xf32>
    %24 = arith.mulf %23, %20 : vector<8x17xf32>
    %cst_13 = arith.constant 1.600000e+04 : f32
    %25 = vector.broadcast %cst_13 : f32 to vector<8x1xf32>
    %26 = arith.mulf %0, %25 : vector<8x1xf32>
    %cst_14 = arith.constant 6.28318548 : f32
    %27 = vector.broadcast %cst_14 : f32 to vector<8x1xf32>
    %28 = arith.mulf %27, %26 : vector<8x1xf32>
    %29 = vector.broadcast %28 : vector<8x1xf32> to vector<8x17xf32>
    %30 = vector.broadcast %2 : vector<1x17xf32> to vector<8x17xf32>
    %31 = arith.mulf %29, %30 : vector<8x17xf32>
    %cst_15 = arith.constant 0.000000e+00 : f32
    %32 = vector.broadcast %cst_15 : f32 to vector<8x17xf32>
    %33 = arith.cmpf oeq, %31, %32 : vector<8x17xf32>
    %cst_16 = arith.constant 1.000000e+00 : f32
    %34 = vector.broadcast %cst_16 : f32 to vector<8x17xf32>
    %35 = arith.select %33, %34, %31 : vector<8x17xi1>, vector<8x17xf32>
    %cst_17 = arith.constant 0.000000e+00 : f32
    %36 = vector.broadcast %cst_17 : f32 to vector<8x17xf32>
    %37 = arith.cmpf oeq, %31, %36 : vector<8x17xf32>
    %38 = math.sin %35 : vector<8x17xf32>
    %39 = arith.divf %38, %35 : vector<8x17xf32>
    %cst_18 = arith.constant 1.000000e+00 : f32
    %40 = vector.broadcast %cst_18 : f32 to vector<8x17xf32>
    %41 = arith.select %37, %40, %39 : vector<8x17xi1>, vector<8x17xf32>
    %cst_19 = arith.constant 2.000000e+00 : f32
    %42 = vector.broadcast %cst_19 : f32 to vector<8x1xf32>
    %43 = arith.mulf %42, %0 : vector<8x1xf32>
    %44 = vector.broadcast %43 : vector<8x1xf32> to vector<8x17xf32>
    %45 = arith.mulf %44, %41 : vector<8x17xf32>
    %46 = arith.subf %24, %45 : vector<8x17xf32>
    %cst_20 = arith.constant dense<0xFF800000> : vector<8xf32>
    %47 = vector.multi_reduction <maximumf>, %46, %cst_20 [1] : vector<8x17xf32> to vector<8xf32>
    %48 = vector.shape_cast %47 : vector<8xf32> to vector<8x1xf32>
    %49 = vector.broadcast %48 : vector<8x1xf32> to vector<8x17xf32>
    %50 = arith.divf %46, %49 : vector<8x17xf32>
    %51 = vector.broadcast %3 : vector<1x17xf32> to vector<8x17xf32>
    %52 = arith.mulf %50, %51 : vector<8x17xf32>
    %c0_21 = arith.constant 0 : index
    %c0_22 = arith.constant 0 : index
    %53 = vector.load %arg5[%c0_21, %c0_22] : memref<8x17xf32, #tpu.memory_space<vmem>>, vector<8x17xf32>
    tpu.vector_store %arg5[%c0_21, %c0_22], %52 {strides = array<i32>} : memref<8x17xf32, #tpu.memory_space<vmem>>, vector<8x17xf32>,
    return
  }
  func.func @transform_0(%arg0: i32) -> (i32, i32) {
    %c0_i32 = arith.constant 0 : i32
    %c0_i32_0 = arith.constant 0 : i32
    %c0_i32_1 = arith.constant 0 : i32
    return %c0_i32, %c0_i32_0 : i32, i32
  }
  func.func @transform_1(%arg0: i32) -> (i32, i32) {
    %c0_i32 = arith.constant 0 : i32
    %c0_i32_0 = arith.constant 0 : i32
    %c0_i32_1 = arith.constant 0 : i32
    return %c0_i32, %c0_i32_0 : i32, i32
  }
  func.func @transform_2(%arg0: i32) -> (i32, i32) {
    %c0_i32 = arith.constant 0 : i32
    %c0_i32_0 = arith.constant 0 : i32
    %c0_i32_1 = arith.constant 0 : i32
    return %c0_i32, %c0_i32_0 : i32, i32
  }
  func.func @transform_3(%arg0: i32) -> (i32, i32) {
    %c0_i32 = arith.constant 0 : i32
    %c0_i32_0 = arith.constant 0 : i32
    %c0_i32_1 = arith.constant 0 : i32
    return %c0_i32, %c0_i32_0 : i32, i32
  }
  func.func @transform_4(%arg0: i32) -> (i32, i32) {
    %c0_i32 = arith.constant 0 : i32
    %c0_i32_0 = arith.constant 0 : i32
    %c0_i32_1 = arith.constant 0 : i32
    return %c0_i32, %c0_i32_0 : i32, i32
  }
}

</mosaic_0001>

<llo_original>
// kernel: tpu_custom_call.1
$region0: #{tpu_custom_call.1}
  #allocation0 [shape = 'u32[]', space=smem, size = 0x4, offset = 0x4, fixed_abs, tag = 'smem constant byte address 0x4 - core index']
  #allocation1 [shape = 'u32[144,128]{1,0:T(1,128)}', space=vmem, size = 0x12000, scoped, tag = 'internal scratch']
  %s0 = inlined_call_operand.vmem [shape: f32[8,1], index: 0, kind: input, shape index: {}]
  %s1 = inlined_call_operand.vmem [shape: f32[8,1], index: 1, kind: input, shape index: {}]
  %s2 = inlined_call_operand.vmem [shape: f32[1,17], index: 2, kind: input, shape index: {}]
  %s3 = inlined_call_operand.vmem [shape: f32[1,17], index: 3, kind: input, shape index: {}]
  %s4 = inlined_call_operand.hbm [shape: f32[8,17], index: 4, kind: output, shape index: {}]
  %s5 = sld [smem:[#allocation0]]
  $region26: #{tpu_custom_call.1} parent=0
    _
  %s7 = ssub.s32 1, %s5
  %s8 = scalar_select 0, %s7, %s5
  $region1: #{tpu_custom_call.1} parent=0
    #allocation2 [shape = 'u8[4096]{0}', space=vmem, size = 0x1000, scoped, tag = 'output window, operand 0, single buffered']
    #allocation3 [shape = 's32[1]{0}', space=sflag, size = 0x4, scoped, tag = 'scoped memory for tpu_custom_call.1']
    %9 = vsyncpa [#allocation3], 0
    // Predicated region
    $region2: #{tpu_custom_call.1} parent=1 // pred_check
      _
    $region3: #{tpu_custom_call.1} parent=1 // pred_check_branch
      %11 = sbr.rel (0) target = $region5
    $region4: #{tpu_custom_call.1} parent=1 // pred_region
      _
    $region5: #{tpu_custom_call.1} parent=1 // pred_fallthru
      _
    // Predicated region
    $region6: #{tpu_custom_call.1} parent=1 // pred_check
      _
    $region7: #{tpu_custom_call.1} parent=1 // pred_check_branch
      %13 = sbr.rel (0) target = $region9
    $region8: #{tpu_custom_call.1} parent=1 // pred_region
      _
    $region9: #{tpu_custom_call.1} parent=1 // pred_fallthru
      _
    // Predicated region
    $region10: #{tpu_custom_call.1} parent=1 // pred_check
      _
    $region11: #{tpu_custom_call.1} parent=1 // pred_check_branch
      %15 = sbr.rel (0) target = $region13
    $region12: #{tpu_custom_call.1} parent=1 // pred_region
      _
    $region13: #{tpu_custom_call.1} parent=1 // pred_fallthru
      _
    // Predicated region
    $region14: #{tpu_custom_call.1} parent=1 // pred_check
      _
    $region15: #{tpu_custom_call.1} parent=1 // pred_check_branch
      %17 = sbr.rel (0) target = $region17
    $region16: #{tpu_custom_call.1} parent=1 // pred_region
      _
    $region17: #{tpu_custom_call.1} parent=1 // pred_fallthru
      _
    %v18 = vld [vmem:[%s0] sm:$0xff]
    %v19 = vld [vmem:[%s1] sm:$0xff]
    %v20 = vld [vmem:[%s2] sm:$0x1]
    %v21 = vld [vmem:[%s3] sm:$0x1]
    %v22 = vmul.f32 %v19, 16000.0
    %v23 = vmul.f32 %v22, 6.2831855
    %25 = vset.pattern.permute.xlu0 0
    %26 = vperm.xlu0 %25, %v23
    %v27 = vpop.permute.xlu0 %26
    %v30 = vlaneseq
    %v31 = vshrl.u32 %v30, 7
    %v32 = vsub.s32 0, %v31
    %v33 = vrot.slane %v20, %v32
    %v35 = vmul.f32 %v27, %v33
    %vm36 = vcmp.eq.f32.partialorder %v35, 0.0
    %v37 = vsel %vm36, 1.0, %v35
    %v38 = vand.u32 2147483647, %v37
    %vm39 = vcmp.le.f32.partialorder %v38, 0.7853982
    %vm40 = vcmp.lt.s32.totalorder %v37, 0
    %v41 = vand.u32 %v37, 2139095040
    %v42 = vshrl.u32 %v41, 23
    %v43 = vsub.s32 %v42, 127
    %v44 = vand.u32 2147483647, %v37
    %v45 = vand.u32 %v44, 8388607
    %v46 = vor.u32 %v45, 8388608
    %v47 = vsub.s32 0, %v46
    %v48 = vadd.s32 %v43, 1
    %vm49 = vcmp.gt.s32.totalorder %v48, 0
    %v50 = vsel %vm49, %v48, 0
    %v51 = vshrl.u32 %v50, 5
    %v52 = vand.u32 %v50, 31
    %v53 = vsub.s32 32, %v52
    %v54 = vshrl.u32 683565275, %v53
    %v55 = vshll.u32 683565275, %v52
    %v56 = vshrl.u32 2475754826, %v53
    %v57 = vor.u32 %v55, %v56
    %v58 = vshll.u32 2475754826, %v52
    %v59 = vshrl.u32 2131351028, %v53
    %v60 = vor.u32 %v58, %v59
    %v61 = vshll.u32 2131351028, %v52
    %v62 = vshrl.u32 2102212464, %v53
    %v63 = vor.u32 %v61, %v62
    %v64 = vshll.u32 2102212464, %v52
    %v65 = vshrl.u32 920167782, %v53
    %v66 = vor.u32 %v64, %v65
    %v67 = vshll.u32 920167782, %v52
    %v68 = vshrl.u32 1326507024, %v53
    %v69 = vor.u32 %v67, %v68
    %vm70 = vcmp.lt.s32.totalorder %v51, 1
    %vm71 = vcmp.lt.s32.totalorder %v51, 2
    %vm72 = vcmp.lt.s32.totalorder %v51, 3
    %vm73 = vcmp.lt.s32.totalorder %v51, 4
    %v74 = vsel %vm70, %v54, %v57
    %v75 = vsel %vm73, %v63, 2102212464
    %v76 = vsel %vm72, %v60, %v75
    %v77 = vsel %vm71, %v74, %v76
    %v78 = vsel %vm70, %v57, %v60
    %v79 = vsel %vm73, %v66, 920167782
    %v80 = vsel %vm72, %v63, %v79
    %v81 = vsel %vm71, %v78, %v80
    %v82 = vsel %vm70, %v60, %v63
    %v83 = vsel %vm73, %v69, 1326507024
    %v84 = vsel %vm72, %v66, %v83
    %v85 = vsel %vm71, %v82, %v84
    %v86 = vshll.u32 %v46, 8
    %v87 = vmul.u32.u64.compose %v86, %v85
    %v88 = vextract.low.u32 %v87
    %v89 = vextract.high.u32 %v87
    %v90 = vmul.u32.u64.compose %v86, %v81
    %v91 = vextract.low.u32 %v90
    %v92 = vextract.high.u32 %v90
    %v93 = vmul.u32 %v86, %v77
    %v94 = vadd.s32 %v89, %v91
    %vm95 = vc.u32 %v89, %v91
    %v96 = vadd.s32 %v92, 1
    %v97 = vsel %vm95, %v96, %v92
    %v98 = vadd.s32 %v93, %v97
    %v99 = vadd.s32 %v98, 536870912
    %v100 = vshrl.u32 %v99, 30
    %v101 = vshll.u32 %v100, 30
    %v102 = vsub.s32 %v98, %v101
    %vm103 = vcmp.lt.s32.totalorder %v102, 0
    %v104 = vsub.s32 0, %v102
    %v105 = vsel %vm103, %v104, %v102
    %v106 = vclz %v105
    %v107 = vsub.s32 %v106, 2
    %vm108 = vcmp.gt.s32.totalorder 0, %v107
    %v109 = vsel %vm108, 0, %v107
    %v110 = vsub.s32 32, %v109
    %v111 = vshll.u32 %v102, %v109
    %v112 = vshrl.u32 %v94, %v110
    %v113 = vor.u32 %v111, %v112
    %v114 = vsub.s32 4294967266, %v109
    %v115 = vadd.s32 %v114, 127
    %v116 = vshll.u32 %v115, 23
    %v117 = vor.u32 4788187, %v116
    %v118 = vand.u32 2147483647, %v117
    %v120 = vcvt.s32.f32 %v113
    %v121 = vmul.f32 %v120, %v118
    %v122 = vxor.u32 %v121, 2147483648
    %v123 = vsel %vm40, %v122, %v121
    %v124 = vsub.s32 4, %v100
    %v125 = vsel %vm40, %v124, %v100
    %v126 = vsel %vm39, %v37, %v123
    %v127 = vsel %vm39, 0, %v125
    %v128 = vcosq.f32.pop %v126
    %v129 = vsinq.f32.pop %v126
    %vm130 = vweird.f32 %v37
    %v131 = vadd.s32 %v127, 3
    %v132 = vand.u32 %v131, 3
    %vm133 = vcmp.lt.s32.totalorder %v132, 2
    %vm134 = vcmp.eq.s32.totalorder %v132, 0
    %v135 = vxor.u32 %v129, 2147483648
    %v136 = vsel %vm134, %v128, %v135
    %vm137 = vcmp.eq.s32.totalorder %v132, 2
    %v138 = vxor.u32 %v128, 2147483648
    %v139 = vsel %vm137, %v138, %v129
    %v140 = vsel %vm133, %v136, %v139
    %v141 = vsel %vm130, nan, %v140
    %v142 = vrcp.pop %v37
    %v143 = vmul.f32 %v141, %v142
    %v144 = vsel %vm36, 1.0, %v143
    %v145 = vmul.f32 %v19, 2.0
    %147 = vset.pattern.permute.xlu0 0
    %148 = vperm.xlu0 %147, %v145
    %v149 = vpop.permute.xlu0 %148
    %v151 = vmul.f32 %v149, %v144
    %v152 = vmul.f32 %v18, 16000.0
    %v153 = vmul.f32 %v152, 6.2831855
    %155 = vset.pattern.permute.xlu0 0
    %156 = vperm.xlu0 %155, %v153
    %v157 = vpop.permute.xlu0 %156
    %v159 = vmul.f32 %v157, %v33
    %vm160 = vcmp.eq.f32.partialorder %v159, 0.0
    %v161 = vsel %vm160, 1.0, %v159
    %v162 = vand.u32 2147483647, %v161
    %vm163 = vcmp.le.f32.partialorder %v162, 0.7853982
    %vm164 = vcmp.lt.s32.totalorder %v161, 0
    %v165 = vand.u32 %v161, 2139095040
    %v166 = vshrl.u32 %v165, 23
    %v167 = vsub.s32 %v166, 127
    %v168 = vand.u32 2147483647, %v161
    %v169 = vand.u32 %v168, 8388607
    %v170 = vor.u32 %v169, 8388608
    %v171 = vsub.s32 0, %v170
    %v172 = vadd.s32 %v167, 1
    %vm173 = vcmp.gt.s32.totalorder %v172, 0
    %v174 = vsel %vm173, %v172, 0
    %v175 = vshrl.u32 %v174, 5
    %v176 = vand.u32 %v174, 31
    %v177 = vsub.s32 32, %v176
    %v178 = vshrl.u32 683565275, %v177
    %v179 = vshll.u32 683565275, %v176
    %v180 = vshrl.u32 2475754826, %v177
    %v181 = vor.u32 %v179, %v180
    %v182 = vshll.u32 2475754826, %v176
    %v183 = vshrl.u32 2131351028, %v177
    %v184 = vor.u32 %v182, %v183
    %v185 = vshll.u32 2131351028, %v176
    %v186 = vshrl.u32 2102212464, %v177
    %v187 = vor.u32 %v185, %v186
    %v188 = vshll.u32 2102212464, %v176
    %v189 = vshrl.u32 920167782, %v177
    %v190 = vor.u32 %v188, %v189
    %v191 = vshll.u32 920167782, %v176
    %v192 = vshrl.u32 1326507024, %v177
    %v193 = vor.u32 %v191, %v192
    %vm194 = vcmp.lt.s32.totalorder %v175, 1
    %vm195 = vcmp.lt.s32.totalorder %v175, 2
    %vm196 = vcmp.lt.s32.totalorder %v175, 3
    %vm197 = vcmp.lt.s32.totalorder %v175, 4
    %v198 = vsel %vm194, %v178, %v181
    %v199 = vsel %vm197, %v187, 2102212464
    %v200 = vsel %vm196, %v184, %v199
    %v201 = vsel %vm195, %v198, %v200
    %v202 = vsel %vm194, %v181, %v184
    %v203 = vsel %vm197, %v190, 920167782
    %v204 = vsel %vm196, %v187, %v203
    %v205 = vsel %vm195, %v202, %v204
    %v206 = vsel %vm194, %v184, %v187
    %v207 = vsel %vm197, %v193, 1326507024
    %v208 = vsel %vm196, %v190, %v207
    %v209 = vsel %vm195, %v206, %v208
    %v210 = vshll.u32 %v170, 8
    %v211 = vmul.u32.u64.compose %v210, %v209
    %v212 = vextract.low.u32 %v211
    %v213 = vextract.high.u32 %v211
    %v214 = vmul.u32.u64.compose %v210, %v205
    %v215 = vextract.low.u32 %v214
    %v216 = vextract.high.u32 %v214
    %v217 = vmul.u32 %v210, %v201
    %v218 = vadd.s32 %v213, %v215
    %vm219 = vc.u32 %v213, %v215
    %v220 = vadd.s32 %v216, 1
    %v221 = vsel %vm219, %v220, %v216
    %v222 = vadd.s32 %v217, %v221
    %v223 = vadd.s32 %v222, 536870912
    %v224 = vshrl.u32 %v223, 30
    %v225 = vshll.u32 %v224, 30
    %v226 = vsub.s32 %v222, %v225
    %vm227 = vcmp.lt.s32.totalorder %v226, 0
    %v228 = vsub.s32 0, %v226
    %v229 = vsel %vm227, %v228, %v226
    %v230 = vclz %v229
    %v231 = vsub.s32 %v230, 2
    %vm232 = vcmp.gt.s32.totalorder 0, %v231
    %v233 = vsel %vm232, 0, %v231
    %v234 = vsub.s32 32, %v233
    %v235 = vshll.u32 %v226, %v233
    %v236 = vshrl.u32 %v218, %v234
    %v237 = vor.u32 %v235, %v236
    %v238 = vsub.s32 4294967266, %v233
    %v239 = vadd.s32 %v238, 127
    %v240 = vshll.u32 %v239, 23
    %v241 = vor.u32 4788187, %v240
    %v242 = vand.u32 2147483647, %v241
    %v244 = vcvt.s32.f32 %v237
    %v245 = vmul.f32 %v244, %v242
    %v246 = vxor.u32 %v245, 2147483648
    %v247 = vsel %vm164, %v246, %v245
    %v248 = vsub.s32 4, %v224
    %v249 = vsel %vm164, %v248, %v224
    %v250 = vsel %vm163, %v161, %v247
    %v251 = vsel %vm163, 0, %v249
    %v252 = vcosq.f32.pop %v250
    %v253 = vsinq.f32.pop %v250
    %vm254 = vweird.f32 %v161
    %v255 = vadd.s32 %v251, 3
    %v256 = vand.u32 %v255, 3
    %vm257 = vcmp.lt.s32.totalorder %v256, 2
    %vm258 = vcmp.eq.s32.totalorder %v256, 0
    %v259 = vxor.u32 %v253, 2147483648
    %v260 = vsel %vm258, %v252, %v259
    %vm261 = vcmp.eq.s32.totalorder %v256, 2
    %v262 = vxor.u32 %v252, 2147483648
    %v263 = vsel %vm261, %v262, %v253
    %v264 = vsel %vm257, %v260, %v263
    %v265 = vsel %vm254, nan, %v264
    %v266 = vrcp.pop %v161
    %v267 = vmul.f32 %v265, %v266
    %v268 = vsel %vm160, 1.0, %v267
    %v269 = vmul.f32 %v18, 2.0
    %271 = vset.pattern.permute.xlu0 0
    %272 = vperm.xlu0 %271, %v269
    %v273 = vpop.permute.xlu0 %272
    %v275 = vmul.f32 %v273, %v268
    %v276 = vsub.f32 %v151, %v275
    %vm277 = vcmask 138240
    %v278 = vsel %vm277, %v276, -inf
    %279 = vmax.xlane.f32.xlu0 %v278
    %v280 = vpop.xlane.xlu0 %279
    %v281 = vrcp.pop %v280
    %v282 = vmul.f32 %v276, %v281
    %v284 = vlaneseq
    %v285 = vshrl.u32 %v284, 7
    %v286 = vsub.s32 0, %v285
    %v287 = vrot.slane %v21, %v286
    %v289 = vmul.f32 %v282, %v287
    %290 = vst.msk [vmem:[#allocation2] sm:$0xff] %vm277, %v289
    // Predicated region
    $region18: #{tpu_custom_call.1} parent=1 // pred_check
      _
    $region19: #{tpu_custom_call.1} parent=1 // pred_check_branch
      %292 = sbr.rel (0) target = $region21
    $region20: #{tpu_custom_call.1} parent=1 // pred_region
      %s294 = ssub.s32 128, 128
      %295 = vsyncadd [#allocation3], %s294
      %s297 = sshll.u32 [#allocation2], 4
      %s298 = int_to_ptr.vmem [resolvable:$true] %s297
      %300 = dma.vmem_to_hbm [thread:$0]  %s298, 128, %s4, [#allocation3]
    $region21: #{tpu_custom_call.1} parent=1 // pred_fallthru
      _
    // Predicated region
    $region22: #{tpu_custom_call.1} parent=1 // pred_check
      _
    $region23: #{tpu_custom_call.1} parent=1 // pred_check_branch
      %302 = sbr.rel (0) target = $region25
    $region24: #{tpu_custom_call.1} parent=1 // pred_region
      %303 = dma.done [#allocation3], 128
    $region25: #{tpu_custom_call.1} parent=1 // pred_fallthru
      _
    %304 = vsyncpa [#allocation3], 1

</llo_original>
